<compile_context>
chip_gen: v7x
topology: tpu7x:2x2x1
jax: 0.10.0
libtpu: 0.0.40
codegen_flags: <defaults>
</compile_context>

<pallas_src>
import jax
import jax.numpy as jnp
from jax.experimental import pallas as pl
from jax.experimental.pallas import tpu as pltpu


def _round_up(x, m):
    return (x + m - 1) // m * m


def _cdiv(x, m):
    return (x + m - 1) // m


# ----------------------------------------------------------------------------
# Generation-aware defaults (tile size in boxes, scoped-VMEM budget).
# ----------------------------------------------------------------------------
def _auto_config():
    vmem_cap = None
    try:
        vmem_cap = pltpu.get_tpu_info().vmem_capacity_bytes
    except Exception:
        vmem_cap = None
    if vmem_cap is not None and vmem_cap >= 128 * 1024 * 1024:
        # v5e / v6e (128 MiB VMEM): ~8 MiB per-array blocks, generous budget.
        return 512 * 1024, 96 * 1024 * 1024
    # v7x (64 MiB VMEM) or unknown: ~4 MiB per-array blocks, modest budget.
    return 256 * 1024, 40 * 1024 * 1024


# ----------------------------------------------------------------------------
# Pallas kernel factory.
# Layout of every (32, tn) tile:
#   sublanes  0..7  = coord 0 (x1 / dx)   of 8 box groups
#   sublanes  8..15 = coord 1 (y1 / dy)
#   sublanes 16..23 = coord 2 (x2 / dw)
#   sublanes 24..31 = coord 3 (y2 / dh)
# mean/std are baked in as Python-float constants (splat into VPU ops).
# ----------------------------------------------------------------------------
def _make_kernel(mean, std):
    m0, m1, m2, m3 = (float(v) for v in mean)
    s0, s1, s2, s3 = (float(v) for v in std)

    def _denorm(rows, s, m):
        t = rows * s
        if m != 0.0:
            t = t + m
        return t

    def kernel(boxes_ref, deltas_ref, out_ref):
        b = boxes_ref[...]        # (32, tn)
        d = deltas_ref[...]       # (32, tn)

        x1, y1, x2, y2 = b[0:8], b[8:16], b[16:24], b[24:32]   # (8, tn) each
        dx = _denorm(d[0:8], s0, m0)
        dy = _denorm(d[8:16], s1, m1)
        dw = _denorm(d[16:24], s2, m2)
        dh = _denorm(d[24:32], s3, m3)

        w = x2 - x1
        h = y2 - y1
        cx = x1 + 0.5 * w
        cy = y1 + 0.5 * h

        pcx = cx + dx * w
        pcy = cy + dy * h
        pw = jnp.exp(dw) * w      # EUP transcendental, full (8, tn) vregs
        ph = jnp.exp(dh) * h
        hw = 0.5 * pw
        hh = 0.5 * ph

        # Direct, full-height, lane-dense row stores (no concatenate/relayout).
        out_ref[0:8, :] = pcx - hw
        out_ref[8:16, :] = pcy - hh
        out_ref[16:24, :] = pcx + hw
        out_ref[24:32, :] = pcy + hh

    return kernel


# ----------------------------------------------------------------------------
# Wrapper: layout plumbing + pallas_call
# ----------------------------------------------------------------------------
def bbox_transform(boxes, deltas, mean=None, std=None, *,
                   tile_boxes=None, vmem_limit_bytes=None):
    """boxes, deltas: (B, N, 4) float32. Returns (B, N, 4) predicted boxes."""
    if mean is None:
        mean = (0.0, 0.0, 0.0, 0.0)
    if std is None:
        std = (0.1, 0.1, 0.2, 0.2)

    B, N, four = boxes.shape
    assert four == 4 and deltas.shape == boxes.shape
    M = B * N

    auto_tile, auto_vmem = _auto_config()
    if tile_boxes is None:
        tile_boxes = auto_tile
    if vmem_limit_bytes is None:
        vmem_limit_bytes = auto_vmem

    # Coord-major, lane-dense layout: coords -> leading axis, boxes -> lanes.
    bt = jnp.transpose(boxes.astype(jnp.float32), (2, 0, 1)).reshape(4, M)
    dt = jnp.transpose(deltas.astype(jnp.float32), (2, 0, 1)).reshape(4, M)

    # Tile width in lanes (columns of the packed (32, cols) layout):
    # always a multiple of 128, capped by what the input actually needs.
    cols_needed = _cdiv(M, 8)
    tn = max(128, (tile_boxes // 8) // 128 * 128)
    tn = min(tn, _round_up(cols_needed, 128))
    # Keep >= 2 grid steps when there is enough data (megacore sharding).
    if cols_needed >= 2 * 128:
        tn = min(tn, _round_up(_cdiv(cols_needed, 2), 128))

    cols = _round_up(cols_needed, tn)
    Mp = 8 * cols
    if Mp != M:
        # Zero padding is benign: w = h = 0 and exp(0) * 0 = 0; sliced off below.
        bt = jnp.pad(bt, ((0, 0), (0, Mp - M)))
        dt = jnp.pad(dt, ((0, 0), (0, Mp - M)))

    # Sublane-dense packing: coordinate c occupies sublanes 8c..8c+7.
    bt = bt.reshape(32, cols)
    dt = dt.reshape(32, cols)

    grid = (cols // tn,)
    out = pl.pallas_call(
        _make_kernel(mean, std),
        out_shape=jax.ShapeDtypeStruct((32, cols), jnp.float32),
        grid_spec=pltpu.PrefetchScalarGridSpec(
            num_scalar_prefetch=0,
            grid=grid,
            in_specs=[
                pl.BlockSpec((32, tn), lambda i: (0, i)),   # boxes tile
                pl.BlockSpec((32, tn), lambda i: (0, i)),   # deltas tile
            ],
            out_specs=pl.BlockSpec((32, tn), lambda i: (0, i)),
        ),
        compiler_params=pltpu.CompilerParams(
            dimension_semantics=("parallel",),
            vmem_limit_bytes=vmem_limit_bytes,
        ),
        cost_estimate=pl.CostEstimate(
            flops=20 * Mp,                 # ~20 flops per box
            transcendentals=2 * Mp,        # 2 exps per box
            bytes_accessed=3 * 16 * Mp,    # 2 inputs + 1 output, 16 B/box each
        ),
    )(bt, dt)

    out = out.reshape(4, Mp)[:, :M].reshape(4, B, N)
    return jnp.transpose(out, (1, 2, 0))


# ----------------------------------------------------------------------------
# Pure-JAX reference (direct transcription of the PyTorch forward)
# ----------------------------------------------------------------------------
def _ref_bbox_transform(boxes, deltas, mean, std):
    widths = boxes[:, :, 2] - boxes[:, :, 0]
    heights = boxes[:, :, 3] - boxes[:, :, 1]
    ctr_x = boxes[:, :, 0] + 0.5 * widths
    ctr_y = boxes[:, :, 1] + 0.5 * heights
    dx = deltas[:, :, 0] * std[0] + mean[0]
    dy = deltas[:, :, 1] * std[1] + mean[1]
    dw = deltas[:, :, 2] * std[2] + mean[2]
    dh = deltas[:, :, 3] * std[3] + mean[3]
    pred_ctr_x = ctr_x + dx * widths
    pred_ctr_y = ctr_y + dy * heights
    pred_w = jnp.exp(dw) * widths
    pred_h = jnp.exp(dh) * heights
    return jnp.stack([pred_ctr_x - 0.5 * pred_w,
                      pred_ctr_y - 0.5 * pred_h,
                      pred_ctr_x + 0.5 * pred_w,
                      pred_ctr_y + 0.5 * pred_h], axis=2)


# ----------------------------------------------------------------------------
if __name__ == "__main__":
    key = jax.random.PRNGKey(0)
    B, NB = 2, 3000   # 3000 anchors/batch -> exercises lane padding + multi-step grid
    k1, k2, k3 = jax.random.split(key, 3)

    x1y1 = jax.random.uniform(k1, (B, NB, 2), jnp.float32, 0.0, 12.0)
    wh = jax.random.uniform(k2, (B, NB, 2), jnp.float32, 1.0, 6.0)
    boxes = jnp.concatenate([x1y1, x1y1 + wh], axis=2)          # valid x1y1x2y2
    deltas = 0.5 * jax.random.normal(k3, (B, NB, 4), jnp.float32)

    # Small tile so the tiny test still runs a multi-step ("parallel") grid;
    # production callers get the generation-aware MiB-scale default.
    out = bbox_transform(boxes, deltas, tile_boxes=1024)
    out = jax.block_until_ready(out)

    # Reference check (module defaults: mean=0, std=[0.1,0.1,0.2,0.2]).
    ref = _ref_bbox_transform(
        boxes, deltas,
        jnp.zeros((4,), jnp.float32),
        jnp.array([0.1, 0.1, 0.2, 0.2], jnp.float32))
    ref = jax.block_until_ready(ref)

    assert out.shape == (B, NB, 4), f"bad output shape {out.shape}"
    err = float(jnp.max(jnp.abs(out - ref)))
    assert err < 5e-4, f"mismatch: max abs err {err}"

    # TODO(synk): the PyTorch module's `.cuda()` device placement has no Pallas
    # equivalent and is irrelevant on TPU.
    print("KERNEL_OK")
</pallas_src>

<mosaic_0001>
module attributes {stable_mosaic.version = 11 : i64} {
  func.func @kernel(%arg0: i32, %arg1: memref<32x128xf32, #tpu.memory_space<vmem>>, %arg2: memref<32x128xf32, #tpu.memory_space<vmem>>, %arg3: memref<32x128xf32, #tpu.memory_space<vmem>>) attributes {dimension_semantics = [#tpu.dimension_semantics<parallel>], iteration_bounds = array<i64: 6>, scalar_prefetch = 0 : i64, scratch_operands = 0 : i64, tpu.core_type = #tpu.core_type<tc>, window_params = [{transform_indices = @transform_0, window_bounds = array<i64: 32, 128>}, {transform_indices = @transform_1, window_bounds = array<i64: 32, 128>}, {transform_indices = @transform_2, window_bounds = array<i64: 32, 128>}]} {
    %c0 = arith.constant 0 : index
    %c0_0 = arith.constant 0 : index
    %0 = vector.load %arg1[%c0, %c0_0] : memref<32x128xf32, #tpu.memory_space<vmem>>, vector<32x128xf32>
    %c0_1 = arith.constant 0 : index
    %c0_2 = arith.constant 0 : index
    %1 = vector.load %arg2[%c0_1, %c0_2] : memref<32x128xf32, #tpu.memory_space<vmem>>, vector<32x128xf32>
    %2 = vector.extract_strided_slice %0 {offsets = [0, 0], sizes = [8, 128], strides = [1, 1]} : vector<32x128xf32> to vector<8x128xf32>
    %3 = vector.extract_strided_slice %0 {offsets = [8, 0], sizes = [8, 128], strides = [1, 1]} : vector<32x128xf32> to vector<8x128xf32>
    %4 = vector.extract_strided_slice %0 {offsets = [16, 0], sizes = [8, 128], strides = [1, 1]} : vector<32x128xf32> to vector<8x128xf32>
    %5 = vector.extract_strided_slice %0 {offsets = [24, 0], sizes = [8, 128], strides = [1, 1]} : vector<32x128xf32> to vector<8x128xf32>
    %6 = vector.extract_strided_slice %1 {offsets = [0, 0], sizes = [8, 128], strides = [1, 1]} : vector<32x128xf32> to vector<8x128xf32>
    %cst = arith.constant 1.000000e-01 : f32
    %7 = vector.broadcast %cst : f32 to vector<8x128xf32>
    %8 = arith.mulf %6, %7 : vector<8x128xf32>
    %9 = vector.extract_strided_slice %1 {offsets = [8, 0], sizes = [8, 128], strides = [1, 1]} : vector<32x128xf32> to vector<8x128xf32>
    %cst_3 = arith.constant 1.000000e-01 : f32
    %10 = vector.broadcast %cst_3 : f32 to vector<8x128xf32>
    %11 = arith.mulf %9, %10 : vector<8x128xf32>
    %12 = vector.extract_strided_slice %1 {offsets = [16, 0], sizes = [8, 128], strides = [1, 1]} : vector<32x128xf32> to vector<8x128xf32>
    %cst_4 = arith.constant 2.000000e-01 : f32
    %13 = vector.broadcast %cst_4 : f32 to vector<8x128xf32>
    %14 = arith.mulf %12, %13 : vector<8x128xf32>
    %15 = vector.extract_strided_slice %1 {offsets = [24, 0], sizes = [8, 128], strides = [1, 1]} : vector<32x128xf32> to vector<8x128xf32>
    %cst_5 = arith.constant 2.000000e-01 : f32
    %16 = vector.broadcast %cst_5 : f32 to vector<8x128xf32>
    %17 = arith.mulf %15, %16 : vector<8x128xf32>
    %18 = arith.subf %4, %2 : vector<8x128xf32>
    %19 = arith.subf %5, %3 : vector<8x128xf32>
    %cst_6 = arith.constant 5.000000e-01 : f32
    %20 = vector.broadcast %cst_6 : f32 to vector<8x128xf32>
    %21 = arith.mulf %20, %18 : vector<8x128xf32>
    %22 = arith.addf %2, %21 : vector<8x128xf32>
    %cst_7 = arith.constant 5.000000e-01 : f32
    %23 = vector.broadcast %cst_7 : f32 to vector<8x128xf32>
    %24 = arith.mulf %23, %19 : vector<8x128xf32>
    %25 = arith.addf %3, %24 : vector<8x128xf32>
    %26 = arith.mulf %8, %18 : vector<8x128xf32>
    %27 = arith.addf %22, %26 : vector<8x128xf32>
    %28 = arith.mulf %11, %19 : vector<8x128xf32>
    %29 = arith.addf %25, %28 : vector<8x128xf32>
    %30 = math.exp %14 : vector<8x128xf32>
    %31 = arith.mulf %30, %18 : vector<8x128xf32>
    %32 = math.exp %17 : vector<8x128xf32>
    %33 = arith.mulf %32, %19 : vector<8x128xf32>
    %cst_8 = arith.constant 5.000000e-01 : f32
    %34 = vector.broadcast %cst_8 : f32 to vector<8x128xf32>
    %35 = arith.mulf %34, %31 : vector<8x128xf32>
    %cst_9 = arith.constant 5.000000e-01 : f32
    %36 = vector.broadcast %cst_9 : f32 to vector<8x128xf32>
    %37 = arith.mulf %36, %33 : vector<8x128xf32>
    %38 = arith.subf %27, %35 : vector<8x128xf32>
    %c0_10 = arith.constant 0 : index
    %c0_11 = arith.constant 0 : index
    %39 = vector.load %arg3[%c0_10, %c0_11] : memref<32x128xf32, #tpu.memory_space<vmem>>, vector<8x128xf32>
    tpu.vector_store %arg3[%c0_10, %c0_11], %38 {strides = array<i32>} : memref<32x128xf32, #tpu.memory_space<vmem>>, vector<8x128xf32>,
    %40 = arith.subf %29, %37 : vector<8x128xf32>
    %c8 = arith.constant 8 : index
    %c0_12 = arith.constant 0 : index
    %41 = vector.load %arg3[%c8, %c0_12] : memref<32x128xf32, #tpu.memory_space<vmem>>, vector<8x128xf32>
    tpu.vector_store %arg3[%c8, %c0_12], %40 {strides = array<i32>} : memref<32x128xf32, #tpu.memory_space<vmem>>, vector<8x128xf32>,
    %42 = arith.addf %27, %35 : vector<8x128xf32>
    %c16 = arith.constant 16 : index
    %c0_13 = arith.constant 0 : index
    %43 = vector.load %arg3[%c16, %c0_13] : memref<32x128xf32, #tpu.memory_space<vmem>>, vector<8x128xf32>
    tpu.vector_store %arg3[%c16, %c0_13], %42 {strides = array<i32>} : memref<32x128xf32, #tpu.memory_space<vmem>>, vector<8x128xf32>,
    %44 = arith.addf %29, %37 : vector<8x128xf32>
    %c24 = arith.constant 24 : index
    %c0_14 = arith.constant 0 : index
    %45 = vector.load %arg3[%c24, %c0_14] : memref<32x128xf32, #tpu.memory_space<vmem>>, vector<8x128xf32>
    tpu.vector_store %arg3[%c24, %c0_14], %44 {strides = array<i32>} : memref<32x128xf32, #tpu.memory_space<vmem>>, vector<8x128xf32>,
    return
  }
  func.func @transform_0(%arg0: i32) -> (i32, i32) {
    %c0_i32 = arith.constant 0 : i32
    %c0_i32_0 = arith.constant 0 : i32
    return %c0_i32, %arg0 : i32, i32
  }
  func.func @transform_1(%arg0: i32) -> (i32, i32) {
    %c0_i32 = arith.constant 0 : i32
    %c0_i32_0 = arith.constant 0 : i32
    return %c0_i32, %arg0 : i32, i32
  }
  func.func @transform_2(%arg0: i32) -> (i32, i32) {
    %c0_i32 = arith.constant 0 : i32
    %c0_i32_0 = arith.constant 0 : i32
    return %c0_i32, %arg0 : i32, i32
  }
}

</mosaic_0001>

<llo_original>
// kernel: tpu_custom_call.1
$region0: #{tpu_custom_call.1}
  #allocation0 [shape = 'u32[]', space=smem, size = 0x4, offset = 0x4, fixed_abs, tag = 'smem constant byte address 0x4 - core index']
  #allocation1 [shape = 'u32[144,128]{1,0:T(1,128)}', space=vmem, size = 0x12000, scoped, tag = 'internal scratch']
  %s0 = inlined_call_operand.hbm [shape: f32[32,768], index: 0, kind: input, shape index: {}]
  %s1 = inlined_call_operand.hbm [shape: f32[32,768], index: 1, kind: input, shape index: {}]
  %s2 = inlined_call_operand.hbm [shape: f32[32,768], index: 2, kind: output, shape index: {}]
  %s3 = sld [smem:[#allocation0]]
  $region49: #{tpu_custom_call.1} parent=0
    _
  %s5 = ssub.s32 1, %s3
  %s6 = scalar_select 0, %s5, %s3
  $region1: #{tpu_custom_call.1} parent=0
    #allocation2 [shape = 'u8[32768]{0}', space=vmem, size = 0x8000, scoped, tag = 'input window, operand 0']
    #allocation3 [shape = 's32[2]{0}', space=sflag, size = 0x8, scoped, tag = 'scoped memory for tpu_custom_call.1']
    #allocation4 [shape = 's32[2]{0}', space=sflag, size = 0x8, scoped, tag = 'scoped memory for tpu_custom_call.1']
    #allocation5 [shape = 'u8[32768]{0}', space=vmem, size = 0x8000, scoped, tag = 'input window, operand 1']
    #allocation6 [shape = 's32[2]{0}', space=sflag, size = 0x8, scoped, tag = 'scoped memory for tpu_custom_call.1']
    #allocation7 [shape = 'u8[32768]{0}', space=vmem, size = 0x8000, scoped, tag = 'output window, operand 0']
    %7 = vsyncpa [#allocation3], 0
    %s8 = scalar_lea.sflag [#allocation3], 1
    %9 = vsyncpa %s8, 0
    %10 = vsyncpa [#allocation6], 0
    %s11 = scalar_lea.sflag [#allocation6], 1
    %12 = vsyncpa %s11, 0
    %13 = vsyncpa [#allocation4], 0
    %s14 = scalar_lea.sflag [#allocation4], 1
    %15 = vsyncpa %s14, 0
    loop: start=0, step=1, limit=8
    $region2: #{tpu_custom_call.1} parent=1 // loop_pre_header
      _
    $region3: #{tpu_custom_call.1} parent=1 // loop_header
      %s17 = sphi 0, %s21
      %p18 = scmp.ge.s32.totalorder %s17, 8
      %s27 = sphi 0, %s29
      %s30 = sphi 0, %s27
      %s31 = sphi 0, %s30
      %s47 = sphi 0, %s31
      %s53 = sphi 0, %s55
      %s56 = sphi 0, %s53
      %s57 = sphi 0, %s56
      %s73 = sphi 0, %s57
      %s79 = sphi 0, %s81
      %s82 = sphi 0, %s79
      %s83 = sphi 0, %s82
      %s99 = sphi 0, %s83
    $region4: #{tpu_custom_call.1} parent=1 // loop_header_branch
      %20 = sbr.rel (%p18) target = $region8
    $region5: #{tpu_custom_call.1} parent=1 // loop_body
      %s22 = ssub.s32 %s17, 1
      %s23 = ssub.s32 %s17, 2
      %s24 = sadd.s32 %s17, 1
      %s25 = ssub.s32 %s17, %s24
      %p26 = scmp.eq.s32.totalorder %s25, 0
      %s28 = sadd.s32 %s27, 1
      %s29 = scalar_select %p26, %s27, %s28
      %p32 = pneg %p26
      %p33 = scmp.eq.s32.totalorder %s17, 5
      %p34 = por %p32, %p33
      %p35 = scmp.ne.s32.totalorder %s27, %s30
      %p36 = scmp.eq.s32.totalorder %s17, 0
      %p37 = por %p35, %p36
      %p38 = scmp.ne.s32.totalorder %s27, %s30
      %p39 = scmp.eq.s32.totalorder %s22, 5
      %p40 = por %p38, %p39
      %p41 = scmp.ne.s32.totalorder %s30, %s31
      %p42 = scmp.eq.s32.totalorder %s22, 0
      %p43 = por %p41, %p42
      %p44 = scmp.ne.s32.totalorder %s30, %s31
      %p45 = scmp.eq.s32.totalorder %s23, 5
      %p46 = por %p44, %p45
      %p48 = scmp.ne.s32.totalorder %s31, %s47
      %p49 = scmp.eq.s32.totalorder %s23, 0
      %p50 = por %p48, %p49
      %s51 = ssub.s32 %s17, %s24
      %p52 = scmp.eq.s32.totalorder %s51, 0
      %s54 = sadd.s32 %s53, 1
      %s55 = scalar_select %p52, %s53, %s54
      %p58 = pneg %p52
      %p59 = scmp.eq.s32.totalorder %s17, 5
      %p60 = por %p58, %p59
      %p61 = scmp.ne.s32.totalorder %s53, %s56
      %p62 = scmp.eq.s32.totalorder %s17, 0
      %p63 = por %p61, %p62
      %p64 = scmp.ne.s32.totalorder %s53, %s56
      %p65 = scmp.eq.s32.totalorder %s22, 5
      %p66 = por %p64, %p65
      %p67 = scmp.ne.s32.totalorder %s56, %s57
      %p68 = scmp.eq.s32.totalorder %s22, 0
      %p69 = por %p67, %p68
      %p70 = scmp.ne.s32.totalorder %s56, %s57
      %p71 = scmp.eq.s32.totalorder %s23, 5
      %p72 = por %p70, %p71
      %p74 = scmp.ne.s32.totalorder %s57, %s73
      %p75 = scmp.eq.s32.totalorder %s23, 0
      %p76 = por %p74, %p75
      %s77 = ssub.s32 %s17, %s24
      %p78 = scmp.eq.s32.totalorder %s77, 0
      %s80 = sadd.s32 %s79, 1
      %s81 = scalar_select %p78, %s79, %s80
      %p84 = pneg %p78
      %p85 = scmp.eq.s32.totalorder %s17, 5
      %p86 = por %p84, %p85
      %p87 = scmp.ne.s32.totalorder %s79, %s82
      %p88 = scmp.eq.s32.totalorder %s17, 0
      %p89 = por %p87, %p88
      %p90 = scmp.ne.s32.totalorder %s79, %s82
      %p91 = scmp.eq.s32.totalorder %s22, 5
      %p92 = por %p90, %p91
      %p93 = scmp.ne.s32.totalorder %s82, %s83
      %p94 = scmp.eq.s32.totalorder %s22, 0
      %p95 = por %p93, %p94
      %p96 = scmp.ne.s32.totalorder %s82, %s83
      %p97 = scmp.eq.s32.totalorder %s23, 5
      %p98 = por %p96, %p97
      %p100 = scmp.ne.s32.totalorder %s83, %s99
      %p101 = scmp.eq.s32.totalorder %s23, 0
      %p102 = por %p100, %p101
      %p103 = scmp.le.s32.totalorder 1, %s17
      %p104 = scmp.lt.s32.totalorder %s17, 7
      %p105 = pnand %p103, %p104
      %p106 = pneg %p105
      // Predicated region
      $region9: #{tpu_custom_call.1} parent=5 // pred_check
        _
      $region10: #{tpu_custom_call.1} parent=5 // pred_check_branch
        %108 = sbr.rel (%p105) target = $region12
      $region11: #{tpu_custom_call.1} parent=5 // pred_region
        %s109 = ssub.s32 %s17, 1
      $region12: #{tpu_custom_call.1} parent=5 // pred_fallthru
        _
      %p110 = scmp.lt.s32.totalorder %s17, 6
      // Predicated region
      $region13: #{tpu_custom_call.1} parent=5 // pred_check
        %p111 = pneg %p110
      $region14: #{tpu_custom_call.1} parent=5 // pred_check_branch
        %113 = sbr.rel (%p111) target = $region16
      $region15: #{tpu_custom_call.1} parent=5 // pred_region
        // Predicated region
        $region17: #{tpu_custom_call.1} parent=15 // pred_check
          %p114 = pneg %p37
        $region18: #{tpu_custom_call.1} parent=15 // pred_check_branch
          %116 = sbr.rel (%p114) target = $region20
        $region19: #{tpu_custom_call.1} parent=15 // pred_region
          %s117 = sand.u32 %s27, 1
          %s118 = scalar_lea.sflag [#allocation3], %s117
          %s119 = sand.u32 %s27, 1
          %s120 = smul.addr %s119, 32
          %s121 = scalar_lea.vmem [#allocation2], %s120
          %s123 = ssub.s32 512, 512
          %124 = vsyncadd %s118, %s123
          %s125 = smul.addr %s17, 128
          %s126 = scalar_lea.hbm %s0, %s125
          %s127 = sshll.u32 %s121, 4
          %s128 = int_to_ptr.vmem [resolvable:$true] %s127
          %133 = dma.hbm_to_vmem [thread:$0]  %s126, 512, %s128, %s118, 768, 128, 8
        $region20: #{tpu_custom_call.1} parent=15 // pred_fallthru
          _
        // Predicated region
        $region21: #{tpu_custom_call.1} parent=15 // pred_check
          %p134 = pneg %p63
        $region22: #{tpu_custom_call.1} parent=15 // pred_check_branch
          %136 = sbr.rel (%p134) target = $region24
        $region23: #{tpu_custom_call.1} parent=15 // pred_region
          %s137 = sand.u32 %s53, 1
          %s138 = scalar_lea.sflag [#allocation6], %s137
          %s139 = sand.u32 %s53, 1
          %s140 = smul.addr %s139, 32
          %s141 = scalar_lea.vmem [#allocation5], %s140
          %s143 = ssub.s32 512, 512
          %144 = vsyncadd %s138, %s143
          %s145 = smul.addr %s17, 128
          %s146 = scalar_lea.hbm %s1, %s145
          %s147 = sshll.u32 %s141, 4
          %s148 = int_to_ptr.vmem [resolvable:$true] %s147
          %153 = dma.hbm_to_vmem [thread:$0]  %s146, 512, %s148, %s138, 768, 128, 8
        $region24: #{tpu_custom_call.1} parent=15 // pred_fallthru
          _
      $region16: #{tpu_custom_call.1} parent=5 // pred_fallthru
        _
      %p154 = scmp.le.s32.totalorder 1, %s17
      %p155 = scmp.lt.s32.totalorder %s17, 7
      %p156 = pnand %p154, %p155
      %p157 = pneg %p156
      // Predicated region
      $region25: #{tpu_custom_call.1} parent=5 // pred_check
        _
      $region26: #{tpu_custom_call.1} parent=5 // pred_check_branch
        %159 = sbr.rel (%p156) target = $region28
      $region27: #{tpu_custom_call.1} parent=5 // pred_region
        %s160 = ssub.s32 %s17, 1
        %s161 = sand.u32 %s30, 1
        %s162 = scalar_lea.sflag [#allocation3], %s161
        %s163 = sand.u32 %s30, 1
        %s164 = smul.addr %s163, 32
        %s165 = scalar_lea.vmem [#allocation2], %s164
        // Predicated region
        $region29: #{tpu_custom_call.1} parent=27 // pred_check
          %p166 = pneg %p43
        $region30: #{tpu_custom_call.1} parent=27 // pred_check_branch
          %168 = sbr.rel (%p166) target = $region32
        $region31: #{tpu_custom_call.1} parent=27 // pred_region
          %169 = dma.done %s162, 512
        $region32: #{tpu_custom_call.1} parent=27 // pred_fallthru
          _
        %s170 = sand.u32 %s56, 1
        %s171 = scalar_lea.sflag [#allocation6], %s170
        %s172 = sand.u32 %s56, 1
        %s173 = smul.addr %s172, 32
        %s174 = scalar_lea.vmem [#allocation5], %s173
        // Predicated region
        $region33: #{tpu_custom_call.1} parent=27 // pred_check
          %p175 = pneg %p69
        $region34: #{tpu_custom_call.1} parent=27 // pred_check_branch
          %177 = sbr.rel (%p175) target = $region36
        $region35: #{tpu_custom_call.1} parent=27 // pred_region
          %178 = dma.done %s171, 512
        $region36: #{tpu_custom_call.1} parent=27 // pred_fallthru
          _
        %s179 = sand.u32 %s30, 1
        %s180 = scalar_lea.sflag [#allocation3], %s179
        %s181 = sand.u32 %s30, 1
        %s182 = smul.addr %s181, 32
        %s183 = scalar_lea.vmem [#allocation2], %s182
        %p184 = pneg %p43
        %p185 = pneg %p40
        %s186 = sand.u32 %s56, 1
        %s187 = scalar_lea.sflag [#allocation6], %s186
        %s188 = sand.u32 %s56, 1
        %s189 = smul.addr %s188, 32
        %s190 = scalar_lea.vmem [#allocation5], %s189
        %p191 = pneg %p69
        %p192 = pneg %p66
        %p193 = pneg %p95
        %p194 = pneg %p92
        %s195 = sand.u32 %s82, 1
        %s196 = scalar_lea.sflag [#allocation4], %s195
        %s197 = sand.u32 %s82, 1
        %s198 = smul.addr %s197, 32
        %s199 = scalar_lea.vmem [#allocation7], %s198
        %v200 = vld [vmem:[%s165] sm:$0xff]
        %v201 = vld [vmem:[%s165 + $0x8] sm:$0xff]
        %v202 = vld [vmem:[%s165 + $0x10] sm:$0xff]
        %v203 = vld [vmem:[%s165 + $0x18] sm:$0xff]
        %v204 = vld [vmem:[%s174] sm:$0xff]
        %v205 = vld [vmem:[%s174 + $0x8] sm:$0xff]
        %v206 = vld [vmem:[%s174 + $0x10] sm:$0xff]
        %v207 = vld [vmem:[%s174 + $0x18] sm:$0xff]
        %v208 = vmul.f32 %v204, 0.1
        %v209 = vmul.f32 %v205, 0.1
        %v210 = vmul.f32 %v206, 0.2
        %v211 = vmul.f32 %v207, 0.2
        %v212 = vsub.f32 %v202, %v200
        %v213 = vsub.f32 %v203, %v201
        %v214 = vmul.f32 %v212, 0.5
        %v215 = vadd.f32 %v200, %v214
        %v216 = vmul.f32 %v213, 0.5
        %v217 = vadd.f32 %v201, %v216
        %v218 = vmul.f32 %v208, %v212
        %v219 = vadd.f32 %v215, %v218
        %v220 = vmul.f32 %v209, %v213
        %v221 = vadd.f32 %v217, %v220
        %v222 = vmul.f32 %v210, 1.442695
        %v223 = vpow.pop %v222
        %v224 = vmul.f32 %v223, %v212
        %v225 = vmul.f32 %v211, 1.442695
        %v226 = vpow.pop %v225
        %v227 = vmul.f32 %v226, %v213
        %v228 = vmul.f32 %v224, 0.5
        %v229 = vmul.f32 %v227, 0.5
        %v230 = vsub.f32 %v219, %v228
        %231 = vst [vmem:[%s199] sm:$0xff] %v230
        %v232 = vsub.f32 %v221, %v229
        %233 = vst [vmem:[%s199 + $0x8] sm:$0xff] %v232
        %v234 = vadd.f32 %v219, %v228
        %235 = vst [vmem:[%s199 + $0x10] sm:$0xff] %v234
        %v236 = vadd.f32 %v221, %v229
        %237 = vst [vmem:[%s199 + $0x18] sm:$0xff] %v236
        %s238 = sand.u32 %s82, 1
        %s239 = scalar_lea.sflag [#allocation4], %s238
        %s240 = sand.u32 %s82, 1
        %s241 = smul.addr %s240, 32
        %s242 = scalar_lea.vmem [#allocation7], %s241
        // Predicated region
        $region37: #{tpu_custom_call.1} parent=27 // pred_check
          %p243 = pneg %p92
        $region38: #{tpu_custom_call.1} parent=27 // pred_check_branch
          %245 = sbr.rel (%p243) target = $region40
        $region39: #{tpu_custom_call.1} parent=27 // pred_region
          %s247 = ssub.s32 512, 512
          %248 = vsyncadd %s239, %s247
          %s249 = smul.addr %s22, 128
          %s250 = scalar_lea.hbm %s2, %s249
          %s251 = sshll.u32 %s242, 4
          %s252 = int_to_ptr.vmem [resolvable:$true] %s251
          %257 = dma.vmem_to_hbm [thread:$0]  %s252, 512, %s250, %s239, 128, 768, 8
        $region40: #{tpu_custom_call.1} parent=27 // pred_fallthru
          _
      $region28: #{tpu_custom_call.1} parent=5 // pred_fallthru
        _
      %p258 = scmp.le.s32.totalorder 2, %s17
      // Predicated region
      $region41: #{tpu_custom_call.1} parent=5 // pred_check
        %p259 = pneg %p258
      $region42: #{tpu_custom_call.1} parent=5 // pred_check_branch
        %261 = sbr.rel (%p259) target = $region44
      $region43: #{tpu_custom_call.1} parent=5 // pred_region
        %s262 = ssub.s32 %s17, 2
        // Predicated region
        $region45: #{tpu_custom_call.1} parent=43 // pred_check
          %p263 = pneg %p98
        $region46: #{tpu_custom_call.1} parent=43 // pred_check_branch
          %265 = sbr.rel (%p263) target = $region48
        $region47: #{tpu_custom_call.1} parent=43 // pred_region
          %s266 = sand.u32 %s83, 1
          %s267 = scalar_lea.sflag [#allocation4], %s266
          %s268 = sand.u32 %s83, 1
          %s269 = smul.addr %s268, 32
          %s270 = scalar_lea.vmem [#allocation7], %s269
          %271 = dma.done %s267, 512
        $region48: #{tpu_custom_call.1} parent=43 // pred_fallthru
          _
      $region44: #{tpu_custom_call.1} parent=5 // pred_fallthru
        _
    $region6: #{tpu_custom_call.1} parent=1 // loop_footer
      %s21 = sadd.s32 1, %s17
    $region7: #{tpu_custom_call.1} parent=1 // loop_footer_branch
      %16 = sbr.rel target = $region3
    $region8: #{tpu_custom_call.1} parent=1 // loop_exit
      _
    %272 = vsyncpa [#allocation3], 1
    %s273 = scalar_lea.sflag [#allocation3], 1
    %274 = vsyncpa %s273, 1
    %275 = vsyncpa [#allocation6], 1
    %s276 = scalar_lea.sflag [#allocation6], 1
    %277 = vsyncpa %s276, 1
    %278 = vsyncpa [#allocation4], 1
    %s279 = scalar_lea.sflag [#allocation4], 1
    %280 = vsyncpa %s279, 1

</llo_original>
